<compile_context>
chip_gen: v6e
topology: v6e:2x2x1
jax: 0.10.0
libtpu: 0.0.40
codegen_flags: <defaults>
</compile_context>

<pallas_src>
import jax
import jax.numpy as jnp
from jax.experimental import pallas as pl
from jax.experimental.pallas import tpu as pltpu

H1 = 256
H2 = 64


def critic_kernel(s_ref, a_ref, w1s_ref, w1a_ref, b1_ref,
                  w2_ref, b2_ref, w3_ref, b3_ref, o_ref):
    # Layer 1: [s | a] @ W1 == s @ W1_s + a @ W1_a  (no concat needed), f32 accumulate.
    h1 = jnp.dot(s_ref[...], w1s_ref[...], preferred_element_type=jnp.float32)
    h1 = h1 + jnp.dot(a_ref[...], w1a_ref[...], preferred_element_type=jnp.float32)
    h1 = jnp.maximum(h1 + b1_ref[...], 0.0)

    # Layer 2: (TB, 256) @ (256, 64), bf16 operands, f32 accumulate, ReLU.
    h2 = jnp.dot(h1.astype(jnp.bfloat16), w2_ref[...],
                 preferred_element_type=jnp.float32)
    h2 = jnp.maximum(h2 + b2_ref[...], 0.0)

    # Layer 3: N=1 "matmul" done on the VPU (+ XLU row reduce) to keep the MXU free.
    q = jnp.sum(h2 * w3_ref[...], axis=-1, keepdims=True) + b3_ref[...]
    o_ref[...] = q.astype(o_ref.dtype)


def _round_up(x, m):
    return ((x + m - 1) // m) * m


def critic_forward(state, action, params, tile_b=1024):
    """state: (B, state_dim), action: (B, action_dim) -> (B, 1) float32."""
    w1, b1, w2, b2, w3, b3 = params          # w: (in, out), b: (1, out)
    B, state_dim = state.shape
    action_dim = action.shape[1]

    # Split W1 so the concat can be eliminated; cast matmul operands to bf16.
    w1_s = w1[:state_dim].astype(jnp.bfloat16)          # (state_dim, 256)
    w1_a = w1[state_dim:].astype(jnp.bfloat16)          # (action_dim, 256)
    w2_b = w2.astype(jnp.bfloat16)                       # (256, 64)
    w3_row = w3.reshape(1, H2).astype(jnp.float32)       # (1, 64) for VPU layer 3
    b3_sc = b3.reshape(1, 1).astype(jnp.float32)         # (1, 1)

    s = state.astype(jnp.bfloat16)
    a = action.astype(jnp.bfloat16)

    # Batch tile: multiple of 8 (sublane rule), capped at tile_b; pad B to a multiple.
    tb = min(tile_b, _round_up(B, 8))
    padded_b = _round_up(B, tb)
    if padded_b != B:
        pad = padded_b - B
        s = jnp.pad(s, ((0, pad), (0, 0)))
        a = jnp.pad(a, ((0, pad), (0, 0)))
    grid = (padded_b // tb,)

    out = pl.pallas_call(
        critic_kernel,
        out_shape=jax.ShapeDtypeStruct((padded_b, 1), jnp.float32),
        grid=grid,
        in_specs=[
            pl.BlockSpec((tb, state_dim), lambda i: (i, 0)),     # state tile
            pl.BlockSpec((tb, action_dim), lambda i: (i, 0)),    # action tile
            pl.BlockSpec((state_dim, H1), lambda i: (0, 0)),     # W1_s (resident)
            pl.BlockSpec((action_dim, H1), lambda i: (0, 0)),    # W1_a (resident)
            pl.BlockSpec((1, H1), lambda i: (0, 0)),             # b1   (resident)
            pl.BlockSpec((H1, H2), lambda i: (0, 0)),            # W2   (resident)
            pl.BlockSpec((1, H2), lambda i: (0, 0)),             # b2   (resident)
            pl.BlockSpec((1, H2), lambda i: (0, 0)),             # W3 row (resident)
            pl.BlockSpec((1, 1), lambda i: (0, 0)),              # b3   (resident)
        ],
        out_specs=pl.BlockSpec((tb, 1), lambda i: (i, 0)),
        compiler_params=pltpu.CompilerParams(
            dimension_semantics=("parallel",)),
    )(s, a, w1_s, w1_a, b1, w2_b, b2, w3_row, b3_sc)

    return out[:B]


def init_critic_params(key, state_dim, action_dim):
    """Deterministic init mimicking nn.Linear's U(-1/sqrt(fan_in), 1/sqrt(fan_in)).

    Weights stored as (in_features, out_features)."""
    dims = [(state_dim + action_dim, H1), (H1, H2), (H2, 1)]
    params = []
    for i, (fan_in, fan_out) in enumerate(dims):
        kw, kb = jax.random.split(jax.random.fold_in(key, i))
        bound = 1.0 / jnp.sqrt(float(fan_in))
        w = jax.random.uniform(kw, (fan_in, fan_out), jnp.float32, -bound, bound)
        b = jax.random.uniform(kb, (1, fan_out), jnp.float32, -bound, bound)
        params += [w, b]
    return tuple(params)


def critic_reference(state, action, params):
    """Plain-JAX reference mirroring the kernel's bf16-operand / f32-accumulate math."""
    w1, b1, w2, b2, w3, b3 = params
    x = jnp.concatenate([state, action], axis=1).astype(jnp.bfloat16)
    h1 = jnp.dot(x, w1.astype(jnp.bfloat16), preferred_element_type=jnp.float32) + b1
    h1 = jnp.maximum(h1, 0.0)
    h2 = jnp.dot(h1.astype(jnp.bfloat16), w2.astype(jnp.bfloat16),
                 preferred_element_type=jnp.float32) + b2
    h2 = jnp.maximum(h2, 0.0)
    return h2 @ w3 + b3


if __name__ == "__main__":
    key = jax.random.PRNGKey(0)
    k_state, k_action, k_params = jax.random.split(key, 3)

    batch, state_dim, action_dim = 8, 24, 8  # small demo shapes consistent with the module
    state = jax.random.normal(k_state, (batch, state_dim), jnp.float32)
    action = jax.random.normal(k_action, (batch, action_dim), jnp.float32)
    params = init_critic_params(k_params, state_dim, action_dim)

    out = critic_forward(state, action, params)
    out = jax.block_until_ready(out)

    ref = critic_reference(state, action, params)
    assert out.shape == (batch, 1)
    assert jnp.allclose(out, ref, atol=2e-2, rtol=2e-2), "mismatch vs reference"

    print("KERNEL_OK")
</pallas_src>

<mosaic_0001>
module attributes {stable_mosaic.version = 11 : i64} {
  func.func @critic_kernel(%arg0: i32, %arg1: memref<8x24xbf16, #tpu.memory_space<vmem>>, %arg2: memref<8x8xbf16, #tpu.memory_space<vmem>>, %arg3: memref<24x256xbf16, #tpu.memory_space<vmem>>, %arg4: memref<8x256xbf16, #tpu.memory_space<vmem>>, %arg5: memref<1x256xf32, #tpu.memory_space<vmem>>, %arg6: memref<256x64xbf16, #tpu.memory_space<vmem>>, %arg7: memref<1x64xf32, #tpu.memory_space<vmem>>, %arg8: memref<1x64xf32, #tpu.memory_space<vmem>>, %arg9: memref<1x1xf32, #tpu.memory_space<vmem>>, %arg10: memref<8x1xf32, #tpu.memory_space<vmem>>) attributes {dimension_semantics = [#tpu.dimension_semantics<parallel>], iteration_bounds = array<i64: 1>, scalar_prefetch = 0 : i64, scratch_operands = 0 : i64, tpu.core_type = #tpu.core_type<tc>, window_params = [{transform_indices = @transform_0, window_bounds = array<i64: 8, 24>}, {transform_indices = @transform_1, window_bounds = array<i64: 8, 8>}, {pipeline_mode = #tpu.pipeline_mode<synchronous>, transform_indices = @transform_2, window_bounds = array<i64: 24, 256>}, {pipeline_mode = #tpu.pipeline_mode<synchronous>, transform_indices = @transform_3, window_bounds = array<i64: 8, 256>}, {pipeline_mode = #tpu.pipeline_mode<synchronous>, transform_indices = @transform_4, window_bounds = array<i64: 1, 256>}, {pipeline_mode = #tpu.pipeline_mode<synchronous>, transform_indices = @transform_5, window_bounds = array<i64: 256, 64>}, {pipeline_mode = #tpu.pipeline_mode<synchronous>, transform_indices = @transform_6, window_bounds = array<i64: 1, 64>}, {pipeline_mode = #tpu.pipeline_mode<synchronous>, transform_indices = @transform_7, window_bounds = array<i64: 1, 64>}, {pipeline_mode = #tpu.pipeline_mode<synchronous>, transform_indices = @transform_8, window_bounds = array<i64: 1, 1>}, {transform_indices = @transform_9, window_bounds = array<i64: 8, 1>}]} {
    %c0 = arith.constant 0 : index
    %c0_0 = arith.constant 0 : index
    %0 = vector.load %arg1[%c0, %c0_0] : memref<8x24xbf16, #tpu.memory_space<vmem>>, vector<8x24xbf16>
    %c0_1 = arith.constant 0 : index
    %c0_2 = arith.constant 0 : index
    %1 = vector.load %arg3[%c0_1, %c0_2] : memref<24x256xbf16, #tpu.memory_space<vmem>>, vector<24x256xbf16>
    %cst = arith.constant dense<0.000000e+00> : vector<8x256xf32>
    %2 = tpu.matmul %0, %1, %cst {dimension_numbers = #tpu.dot_dimension_numbers<[1], [0], [0], [1], [0, 0, 1, 1], [], []>} : vector<8x24xbf16>, vector<24x256xbf16>, vector<8x256xf32> -> vector<8x256xf32>
    %c0_3 = arith.constant 0 : index
    %c0_4 = arith.constant 0 : index
    %3 = vector.load %arg2[%c0_3, %c0_4] : memref<8x8xbf16, #tpu.memory_space<vmem>>, vector<8x8xbf16>
    %c0_5 = arith.constant 0 : index
    %c0_6 = arith.constant 0 : index
    %4 = vector.load %arg4[%c0_5, %c0_6] : memref<8x256xbf16, #tpu.memory_space<vmem>>, vector<8x256xbf16>
    %cst_7 = arith.constant dense<0.000000e+00> : vector<8x256xf32>
    %5 = tpu.matmul %3, %4, %cst_7 {dimension_numbers = #tpu.dot_dimension_numbers<[1], [0], [0], [1], [0, 0, 1, 1], [], []>} : vector<8x8xbf16>, vector<8x256xbf16>, vector<8x256xf32> -> vector<8x256xf32>
    %6 = arith.addf %2, %5 : vector<8x256xf32>
    %c0_8 = arith.constant 0 : index
    %c0_9 = arith.constant 0 : index
    %7 = vector.load %arg5[%c0_8, %c0_9] : memref<1x256xf32, #tpu.memory_space<vmem>>, vector<1x256xf32>
    %8 = vector.broadcast %7 : vector<1x256xf32> to vector<8x256xf32>
    %9 = arith.addf %6, %8 : vector<8x256xf32>
    %cst_10 = arith.constant 0.000000e+00 : f32
    %10 = vector.broadcast %cst_10 : f32 to vector<8x256xf32>
    %11 = arith.maximumf %9, %10 : vector<8x256xf32>
    %12 = arith.truncf %11 : vector<8x256xf32> to vector<8x256xbf16>
    %c0_11 = arith.constant 0 : index
    %c0_12 = arith.constant 0 : index
    %13 = vector.load %arg6[%c0_11, %c0_12] : memref<256x64xbf16, #tpu.memory_space<vmem>>, vector<256x64xbf16>
    %cst_13 = arith.constant dense<0.000000e+00> : vector<8x64xf32>
    %14 = tpu.matmul %12, %13, %cst_13 {dimension_numbers = #tpu.dot_dimension_numbers<[1], [0], [0], [1], [0, 0, 1, 1], [], []>} : vector<8x256xbf16>, vector<256x64xbf16>, vector<8x64xf32> -> vector<8x64xf32>
    %c0_14 = arith.constant 0 : index
    %c0_15 = arith.constant 0 : index
    %15 = vector.load %arg7[%c0_14, %c0_15] : memref<1x64xf32, #tpu.memory_space<vmem>>, vector<1x64xf32>
    %16 = vector.broadcast %15 : vector<1x64xf32> to vector<8x64xf32>
    %17 = arith.addf %14, %16 : vector<8x64xf32>
    %cst_16 = arith.constant 0.000000e+00 : f32
    %18 = vector.broadcast %cst_16 : f32 to vector<8x64xf32>
    %19 = arith.maximumf %17, %18 : vector<8x64xf32>
    %c0_17 = arith.constant 0 : index
    %c0_18 = arith.constant 0 : index
    %20 = vector.load %arg8[%c0_17, %c0_18] : memref<1x64xf32, #tpu.memory_space<vmem>>, vector<1x64xf32>
    %21 = vector.broadcast %20 : vector<1x64xf32> to vector<8x64xf32>
    %22 = arith.mulf %19, %21 : vector<8x64xf32>
    %cst_19 = arith.constant dense<0.000000e+00> : vector<8xf32>
    %23 = vector.multi_reduction <add>, %22, %cst_19 [1] : vector<8x64xf32> to vector<8xf32>
    %24 = vector.shape_cast %23 : vector<8xf32> to vector<8x1xf32>
    %c0_20 = arith.constant 0 : index
    %c0_21 = arith.constant 0 : index
    %25 = vector.load %arg9[%c0_20, %c0_21] : memref<1x1xf32, #tpu.memory_space<vmem>>, vector<1x1xf32>
    %26 = vector.broadcast %25 : vector<1x1xf32> to vector<8x1xf32>
    %27 = arith.addf %24, %26 : vector<8x1xf32>
    %c0_22 = arith.constant 0 : index
    %c0_23 = arith.constant 0 : index
    %28 = vector.load %arg10[%c0_22, %c0_23] : memref<8x1xf32, #tpu.memory_space<vmem>>, vector<8x1xf32>
    tpu.vector_store %arg10[%c0_22, %c0_23], %27 {strides = array<i32>} : memref<8x1xf32, #tpu.memory_space<vmem>>, vector<8x1xf32>,
    return
  }
  func.func @transform_0(%arg0: i32) -> (i32, i32) {
    %c0_i32 = arith.constant 0 : i32
    %c0_i32_0 = arith.constant 0 : i32
    return %arg0, %c0_i32 : i32, i32
  }
  func.func @transform_1(%arg0: i32) -> (i32, i32) {
    %c0_i32 = arith.constant 0 : i32
    %c0_i32_0 = arith.constant 0 : i32
    return %arg0, %c0_i32 : i32, i32
  }
  func.func @transform_2(%arg0: i32) -> (i32, i32) {
    %c0_i32 = arith.constant 0 : i32
    %c0_i32_0 = arith.constant 0 : i32
    %c0_i32_1 = arith.constant 0 : i32
    return %c0_i32, %c0_i32_0 : i32, i32
  }
  func.func @transform_3(%arg0: i32) -> (i32, i32) {
    %c0_i32 = arith.constant 0 : i32
    %c0_i32_0 = arith.constant 0 : i32
    %c0_i32_1 = arith.constant 0 : i32
    return %c0_i32, %c0_i32_0 : i32, i32
  }
  func.func @transform_4(%arg0: i32) -> (i32, i32) {
    %c0_i32 = arith.constant 0 : i32
    %c0_i32_0 = arith.constant 0 : i32
    %c0_i32_1 = arith.constant 0 : i32
    return %c0_i32, %c0_i32_0 : i32, i32
  }
  func.func @transform_5(%arg0: i32) -> (i32, i32) {
    %c0_i32 = arith.constant 0 : i32
    %c0_i32_0 = arith.constant 0 : i32
    %c0_i32_1 = arith.constant 0 : i32
    return %c0_i32, %c0_i32_0 : i32, i32
  }
  func.func @transform_6(%arg0: i32) -> (i32, i32) {
    %c0_i32 = arith.constant 0 : i32
    %c0_i32_0 = arith.constant 0 : i32
    %c0_i32_1 = arith.constant 0 : i32
    return %c0_i32, %c0_i32_0 : i32, i32
  }
  func.func @transform_7(%arg0: i32) -> (i32, i32) {
    %c0_i32 = arith.constant 0 : i32
    %c0_i32_0 = arith.constant 0 : i32
    %c0_i32_1 = arith.constant 0 : i32
    return %c0_i32, %c0_i32_0 : i32, i32
  }
  func.func @transform_8(%arg0: i32) -> (i32, i32) {
    %c0_i32 = arith.constant 0 : i32
    %c0_i32_0 = arith.constant 0 : i32
    %c0_i32_1 = arith.constant 0 : i32
    return %c0_i32, %c0_i32_0 : i32, i32
  }
  func.func @transform_9(%arg0: i32) -> (i32, i32) {
    %c0_i32 = arith.constant 0 : i32
    %c0_i32_0 = arith.constant 0 : i32
    return %arg0, %c0_i32 : i32, i32
  }
}

</mosaic_0001>

<llo_original>
// kernel: tpu_custom_call.1
$region0: #{tpu_custom_call.1}
  #allocation0 [shape = 'u32[]', space=smem, size = 0x4, offset = 0x4, fixed_abs, tag = 'smem constant byte address 0x4 - core index']
  #allocation1 [shape = 'u32[144,128]{1,0:T(1,128)}', space=vmem, size = 0x12000, scoped, tag = 'internal scratch']
  #allocation2 [shape = 'f32[1,1]{1,0:T(1,128)S(1)}', space=vmem, size = 0x200, scoped, tag = 'scoped memory for tpu_custom_call.1']
  %s0 = inlined_call_operand.vmem [shape: bf16[8,24], index: 0, kind: input, shape index: {}]
  %s1 = inlined_call_operand.vmem [shape: bf16[8,8], index: 1, kind: input, shape index: {}]
  %s2 = inlined_call_operand.vmem [shape: bf16[24,256], index: 2, kind: input, shape index: {}]
  %s3 = inlined_call_operand.vmem [shape: bf16[8,256], index: 3, kind: input, shape index: {}]
  %s4 = inlined_call_operand.vmem [shape: f32[1,256], index: 4, kind: input, shape index: {}]
  %s5 = inlined_call_operand.vmem [shape: bf16[256,64], index: 5, kind: input, shape index: {}]
  %s6 = inlined_call_operand.vmem [shape: f32[1,64], index: 6, kind: input, shape index: {}]
  %s7 = inlined_call_operand.vmem [shape: f32[1,64], index: 7, kind: input, shape index: {}]
  %s8 = inlined_call_operand.<no memory space> [shape: f32[1,1], index: 8, kind: input, shape index: {}]
  %s9 = inlined_call_operand.vmem [shape: f32[8,1], index: 9, kind: output, shape index: {}]
  %s10 = sld [smem:[#allocation0]]
  $region46: #{tpu_custom_call.1} parent=0
    _
  %s12 = ssub.s32 1, %s10
  %s13 = scalar_select 0, %s12, %s10
  %v14 = vstv %s8
  %15 = vst [vmem:[#allocation2] sm:$0x1] %v14
  // Predicated region
  $region2: #{tpu_custom_call.1} parent=0 // pred_check
    _
  $region3: #{tpu_custom_call.1} parent=0 // pred_check_branch
    %17 = sbr.rel (0) target = $region5
  $region4: #{tpu_custom_call.1} parent=0 // pred_region
    _
  $region5: #{tpu_custom_call.1} parent=0 // pred_fallthru
    _
  // Predicated region
  $region6: #{tpu_custom_call.1} parent=0 // pred_check
    _
  $region7: #{tpu_custom_call.1} parent=0 // pred_check_branch
    %19 = sbr.rel (0) target = $region9
  $region8: #{tpu_custom_call.1} parent=0 // pred_region
    _
  $region9: #{tpu_custom_call.1} parent=0 // pred_fallthru
    _
  // Predicated region
  $region10: #{tpu_custom_call.1} parent=0 // pred_check
    _
  $region11: #{tpu_custom_call.1} parent=0 // pred_check_branch
    %21 = sbr.rel (0) target = $region13
  $region12: #{tpu_custom_call.1} parent=0 // pred_region
    _
  $region13: #{tpu_custom_call.1} parent=0 // pred_fallthru
    _
  // Predicated region
  $region14: #{tpu_custom_call.1} parent=0 // pred_check
    _
  $region15: #{tpu_custom_call.1} parent=0 // pred_check_branch
    %23 = sbr.rel (0) target = $region17
  $region16: #{tpu_custom_call.1} parent=0 // pred_region
    _
  $region17: #{tpu_custom_call.1} parent=0 // pred_fallthru
    _
  // Predicated region
  $region18: #{tpu_custom_call.1} parent=0 // pred_check
    _
  $region19: #{tpu_custom_call.1} parent=0 // pred_check_branch
    %25 = sbr.rel (0) target = $region21
  $region20: #{tpu_custom_call.1} parent=0 // pred_region
    _
  $region21: #{tpu_custom_call.1} parent=0 // pred_fallthru
    _
  // Predicated region
  $region22: #{tpu_custom_call.1} parent=0 // pred_check
    _
  $region23: #{tpu_custom_call.1} parent=0 // pred_check_branch
    %27 = sbr.rel (0) target = $region25
  $region24: #{tpu_custom_call.1} parent=0 // pred_region
    _
  $region25: #{tpu_custom_call.1} parent=0 // pred_fallthru
    _
  // Predicated region
  $region26: #{tpu_custom_call.1} parent=0 // pred_check
    _
  $region27: #{tpu_custom_call.1} parent=0 // pred_check_branch
    %29 = sbr.rel (0) target = $region29
  $region28: #{tpu_custom_call.1} parent=0 // pred_region
    _
  $region29: #{tpu_custom_call.1} parent=0 // pred_fallthru
    _
  // Predicated region
  $region30: #{tpu_custom_call.1} parent=0 // pred_check
    _
  $region31: #{tpu_custom_call.1} parent=0 // pred_check_branch
    %31 = sbr.rel (0) target = $region33
  $region32: #{tpu_custom_call.1} parent=0 // pred_region
    _
  $region33: #{tpu_custom_call.1} parent=0 // pred_fallthru
    _
  // Predicated region
  $region34: #{tpu_custom_call.1} parent=0 // pred_check
    _
  $region35: #{tpu_custom_call.1} parent=0 // pred_check_branch
    %33 = sbr.rel (0) target = $region37
  $region36: #{tpu_custom_call.1} parent=0 // pred_region
    _
  $region37: #{tpu_custom_call.1} parent=0 // pred_fallthru
    _
  %v35 = vld [vmem:[%s0] sm:$0xf]
  %v36 = vld [vmem:[%s2] sm:$0xff]
  %v37 = vld [vmem:[%s2 + $0x8] sm:$0xff]
  %v38 = vld [vmem:[%s2 + $0x10] sm:$0xff]
  %v39 = vld [vmem:[%s1] sm:$0xf]
  %v40 = vld [vmem:[%s3] sm:$0xff]
  %v42 = vunpack.c.l.b16 %v40
  %v43 = vunpack.c.h.b16 %v40
  %v44 = vpack.c.b16 %v42, %v42
  %v45 = vpack.c.b16 %v43, %v43
  %vm46 = vcmask 64512
  %v48 = vsel %vm46, %v39, 0
  %vm50 = vcmask 1043456
  %v52 = vsel %vm50, %v44, 0
  %v55 = vsel %vm50, %v45, 0
  %57 = vmatprep.subr.bf16.mxu0 0
  %58 = vmatpush1.bf16.msra.mxu0 0
  %59 = vmatprep.subr.bf16.mxu0 0
  %60 = vmatpush1.bf16.msra.mxu0 0
  %61 = vmatprep.subr.bf16.mxu0 0
  %62 = vmatpush1.bf16.msra.mxu0 0
  %63 = vmatprep.subr.bf16.mxu0 0
  %64 = vmatpush1.bf16.msra.mxu0 0
  %65 = vmatprep.subr.bf16.mxu0 0
  %66 = vmatpush1.bf16.msra.mxu0 0
  %67 = vmatprep.subr.bf16.mxu0 0
  %68 = vmatpush1.bf16.msra.mxu0 0
  %69 = vmatprep.subr.bf16.mxu0 0
  %70 = vmatpush1.bf16.msra.mxu0 0
  %71 = vmatprep.subr.bf16.mxu0 %v55
  %72 = vmatpush1.bf16.msra.mxu0 %v52
  %73 = vmatprep.subr.bf16.mxu0 0
  %74 = vmatpush2.bf16.msra.mxu0 0
  %75 = vmatprep.subr.bf16.mxu0 0
  %76 = vmatpush2.bf16.msra.mxu0 0
  %77 = vmatprep.subr.bf16.mxu0 0
  %78 = vmatpush2.bf16.msra.mxu0 0
  %79 = vmatprep.subr.bf16.mxu0 0
  %80 = vmatpush2.bf16.msra.mxu0 0
  %81 = vmatprep.subr.bf16.mxu0 0
  %82 = vmatpush2.bf16.msra.mxu0 0
  %83 = vmatprep.subr.bf16.mxu0 0
  %84 = vmatpush2.bf16.msra.mxu0 0
  %85 = vmatprep.subr.bf16.mxu0 0
  %86 = vmatpush2.bf16.msra.mxu0 0
  %87 = vmatprep.subr.bf16.mxu0 0
  %88 = vmatpush2.bf16.msra.mxu0 0
  %89 = vmatprep.mubr.bf16.mxu0 0
  %90 = vmatmul.mubr.bf16.gmra.mxu0 %v48
  %v91 = vpop.f32.mrf.mxu0
  %v92 = vadd.f32 0.0, %v91
  %v93 = vpop.f32.mrf.mxu0
  %v94 = vadd.f32 0.0, %v93
  %v95 = vpop.f32.mrf.mxu0
  %v96 = vpop.f32.mrf.mxu0
  %97 = vdwg.mxu0
  %v101 = vunpack.c.l.b16 %v36
  %v102 = vunpack.c.h.b16 %v36
  %v103 = vunpack.c.l.b16 %v37
  %v104 = vunpack.c.h.b16 %v37
  %v105 = vunpack.c.l.b16 %v38
  %v106 = vunpack.c.h.b16 %v38
  %v107 = vpack.c.b16 %v103, %v101
  %v108 = vpack.c.b16 %v104, %v102
  %v109 = vpack.c.b16 %v105, %v105
  %v110 = vpack.c.b16 %v106, %v106
  %vm113 = vcmask 195584
  %v115 = vsel %vm113, %v35, 0
  %v118 = vsel %vm50, %v109, 0
  %v121 = vsel %vm50, %v110, 0
  %123 = vmatprep.subr.bf16.mxu0 0
  %124 = vmatpush1.bf16.msra.mxu0 0
  %125 = vmatprep.subr.bf16.mxu0 0
  %126 = vmatpush1.bf16.msra.mxu0 0
  %127 = vmatprep.subr.bf16.mxu0 0
  %128 = vmatpush1.bf16.msra.mxu0 0
  %129 = vmatprep.subr.bf16.mxu0 0
  %130 = vmatpush1.bf16.msra.mxu0 0
  %131 = vmatprep.subr.bf16.mxu0 0
  %132 = vmatpush1.bf16.msra.mxu0 0
  %133 = vmatprep.subr.bf16.mxu0 0
  %134 = vmatpush1.bf16.msra.mxu0 0
  %135 = vmatprep.subr.bf16.mxu0 %v121
  %136 = vmatpush1.bf16.msra.mxu0 %v118
  %137 = vmatprep.subr.bf16.mxu0 %v108
  %138 = vmatpush1.bf16.msra.mxu0 %v107
  %139 = vmatprep.subr.bf16.mxu0 0
  %140 = vmatpush2.bf16.msra.mxu0 0
  %141 = vmatprep.subr.bf16.mxu0 0
  %142 = vmatpush2.bf16.msra.mxu0 0
  %143 = vmatprep.subr.bf16.mxu0 0
  %144 = vmatpush2.bf16.msra.mxu0 0
  %145 = vmatprep.subr.bf16.mxu0 0
  %146 = vmatpush2.bf16.msra.mxu0 0
  %147 = vmatprep.subr.bf16.mxu0 0
  %148 = vmatpush2.bf16.msra.mxu0 0
  %149 = vmatprep.subr.bf16.mxu0 0
  %150 = vmatpush2.bf16.msra.mxu0 0
  %151 = vmatprep.subr.bf16.mxu0 0
  %152 = vmatpush2.bf16.msra.mxu0 0
  %153 = vmatprep.subr.bf16.mxu0 0
  %154 = vmatpush2.bf16.msra.mxu0 0
  %155 = vmatprep.mubr.bf16.mxu0 0
  %156 = vmatmul.mubr.bf16.gmra.mxu0 %v115
  %v157 = vpop.f32.mrf.mxu0
  %v158 = vadd.f32 %v92, %v157
  %v159 = vpop.f32.mrf.mxu0
  %v160 = vadd.f32 %v94, %v159
  %v161 = vpop.f32.mrf.mxu0
  %v162 = vpop.f32.mrf.mxu0
  %163 = vdwg.mxu0
  %v164 = vld [vmem:[%s4] sm:$0x3]
  %v166 = vlaneseq
  %v167 = vshrl.u32 %v166, 7
  %v168 = vsub.s32 0, %v167
  %v169 = vrot.slane %v164, %v168
  %v170 = vlaneseq
  %v171 = vshrl.u32 %v170, 7
  %v172 = vsub.s32 1, %v171
  %v173 = vrot.slane %v164, %v172
  %v176 = vadd.f32 %v158, %v169
  %v177 = vadd.f32 %v160, %v173
  %v178 = vmax.f32 %v176, 0.0
  %v179 = vmax.f32 %v177, 0.0
  %v180 = vpack.c.bf16 %v178, %v178
  %v181 = vpack.c.bf16 %v179, %v179
  %v182 = vld [vmem:[%s5] sm:$0xf]
  %v183 = vld [vmem:[%s5 + $0x4] sm:$0xf]
  %v184 = vld [vmem:[%s5 + $0x8] sm:$0xf]
  %v185 = vld [vmem:[%s5 + $0xc] sm:$0xf]
  %v186 = vld [vmem:[%s5 + $0x10] sm:$0xf]
  %v187 = vld [vmem:[%s5 + $0x14] sm:$0xf]
  %v188 = vld [vmem:[%s5 + $0x18] sm:$0xf]
  %v189 = vld [vmem:[%s5 + $0x1c] sm:$0xf]
  %v190 = vld [vmem:[%s5 + $0x20] sm:$0xf]
  %v191 = vld [vmem:[%s5 + $0x24] sm:$0xf]
  %v192 = vld [vmem:[%s5 + $0x28] sm:$0xf]
  %v193 = vld [vmem:[%s5 + $0x2c] sm:$0xf]
  %v194 = vld [vmem:[%s5 + $0x30] sm:$0xf]
  %v195 = vld [vmem:[%s5 + $0x34] sm:$0xf]
  %v196 = vld [vmem:[%s5 + $0x38] sm:$0xf]
  %v197 = vld [vmem:[%s5 + $0x3c] sm:$0xf]
  %v198 = vld [vmem:[%s5 + $0x40] sm:$0xf]
  %v199 = vld [vmem:[%s5 + $0x44] sm:$0xf]
  %v200 = vld [vmem:[%s5 + $0x48] sm:$0xf]
  %v201 = vld [vmem:[%s5 + $0x4c] sm:$0xf]
  %v202 = vld [vmem:[%s5 + $0x50] sm:$0xf]
  %v203 = vld [vmem:[%s5 + $0x54] sm:$0xf]
  %v204 = vld [vmem:[%s5 + $0x58] sm:$0xf]
  %v205 = vld [vmem:[%s5 + $0x5c] sm:$0xf]
  %v206 = vld [vmem:[%s5 + $0x60] sm:$0xf]
  %v207 = vld [vmem:[%s5 + $0x64] sm:$0xf]
  %v208 = vld [vmem:[%s5 + $0x68] sm:$0xf]
  %v209 = vld [vmem:[%s5 + $0x6c] sm:$0xf]
  %v210 = vld [vmem:[%s5 + $0x70] sm:$0xf]
  %v211 = vld [vmem:[%s5 + $0x74] sm:$0xf]
  %v212 = vld [vmem:[%s5 + $0x78] sm:$0xf]
  %v213 = vld [vmem:[%s5 + $0x7c] sm:$0xf]
  %v214 = vld [vmem:[%s6] sm:$0x1]
  %v216 = vlaneseq
  %v217 = vshrl.u32 %v216, 7
  %v218 = vsub.s32 0, %v217
  %v219 = vrot.slane %v214, %v218
  %v253 = vunpack.c.l.b16 %v182
  %v254 = vunpack.c.l.b16 %v183
  %v255 = vunpack.c.l.b16 %v184
  %v256 = vunpack.c.l.b16 %v185
  %v257 = vunpack.c.l.b16 %v186
  %v258 = vunpack.c.l.b16 %v187
  %v259 = vunpack.c.l.b16 %v188
  %v260 = vunpack.c.l.b16 %v189
  %v261 = vunpack.c.l.b16 %v190
  %v262 = vunpack.c.l.b16 %v191
  %v263 = vunpack.c.l.b16 %v192
  %v264 = vunpack.c.l.b16 %v193
  %v265 = vunpack.c.l.b16 %v194
  %v266 = vunpack.c.l.b16 %v195
  %v267 = vunpack.c.l.b16 %v196
  %v268 = vunpack.c.l.b16 %v197
  %v269 = vunpack.c.l.b16 %v198
  %v270 = vunpack.c.l.b16 %v199
  %v271 = vunpack.c.l.b16 %v200
  %v272 = vunpack.c.l.b16 %v201
  %v273 = vunpack.c.l.b16 %v202
  %v274 = vunpack.c.l.b16 %v203
  %v275 = vunpack.c.l.b16 %v204
  %v276 = vunpack.c.l.b16 %v205
  %v277 = vunpack.c.l.b16 %v206
  %v278 = vunpack.c.l.b16 %v207
  %v279 = vunpack.c.l.b16 %v208
  %v280 = vunpack.c.l.b16 %v209
  %v281 = vunpack.c.l.b16 %v210
  %v282 = vunpack.c.l.b16 %v211
  %v283 = vunpack.c.l.b16 %v212
  %v284 = vunpack.c.l.b16 %v213
  %v285 = vpack.c.b16 %v254, %v253
  %v286 = vpack.c.b16 %v256, %v255
  %v287 = vpack.c.b16 %v258, %v257
  %v288 = vpack.c.b16 %v260, %v259
  %v289 = vpack.c.b16 %v262, %v261
  %v290 = vpack.c.b16 %v264, %v263
  %v291 = vpack.c.b16 %v266, %v265
  %v292 = vpack.c.b16 %v268, %v267
  %v293 = vpack.c.b16 %v270, %v269
  %v294 = vpack.c.b16 %v272, %v271
  %v295 = vpack.c.b16 %v274, %v273
  %v296 = vpack.c.b16 %v276, %v275
  %v297 = vpack.c.b16 %v278, %v277
  %v298 = vpack.c.b16 %v280, %v279
  %v299 = vpack.c.b16 %v282, %v281
  %v300 = vpack.c.b16 %v284, %v283
  %317 = vmatprep.subr.bf16.mxu0 0
  %318 = vmatpush1.bf16.msra.mxu0 %v292
  %319 = vmatprep.subr.bf16.mxu0 0
  %320 = vmatpush1.bf16.msra.mxu0 %v291
  %321 = vmatprep.subr.bf16.mxu0 0
  %322 = vmatpush1.bf16.msra.mxu0 %v290
  %323 = vmatprep.subr.bf16.mxu0 0
  %324 = vmatpush1.bf16.msra.mxu0 %v289
  %325 = vmatprep.subr.bf16.mxu0 0
  %326 = vmatpush1.bf16.msra.mxu0 %v288
  %327 = vmatprep.subr.bf16.mxu0 0
  %328 = vmatpush1.bf16.msra.mxu0 %v287
  %329 = vmatprep.subr.bf16.mxu0 0
  %330 = vmatpush1.bf16.msra.mxu0 %v286
  %331 = vmatprep.subr.bf16.mxu0 0
  %332 = vmatpush1.bf16.msra.mxu0 %v285
  %333 = vmatprep.subr.bf16.mxu0 0
  %334 = vmatpush2.bf16.msra.mxu0 %v300
  %335 = vmatprep.subr.bf16.mxu0 0
  %336 = vmatpush2.bf16.msra.mxu0 %v299
  %337 = vmatprep.subr.bf16.mxu0 0
  %338 = vmatpush2.bf16.msra.mxu0 %v298
  %339 = vmatprep.subr.bf16.mxu0 0
  %340 = vmatpush2.bf16.msra.mxu0 %v297
  %341 = vmatprep.subr.bf16.mxu0 0
  %342 = vmatpush2.bf16.msra.mxu0 %v296
  %343 = vmatprep.subr.bf16.mxu0 0
  %344 = vmatpush2.bf16.msra.mxu0 %v295
  %345 = vmatprep.subr.bf16.mxu0 0
  %346 = vmatpush2.bf16.msra.mxu0 %v294
  %347 = vmatprep.subr.bf16.mxu0 0
  %348 = vmatpush2.bf16.msra.mxu0 %v293
  %349 = vmatprep.mubr.bf16.mxu0 %v181
  %350 = vmatmul.mubr.bf16.gmra.mxu0 %v180
  %v351 = vpop.f32.mrf.mxu0
  %v352 = vadd.f32 %v219, %v351
  %v353 = vpop.f32.mrf.mxu0
  %v354 = vpop.f32.mrf.mxu0
  %v355 = vpop.f32.mrf.mxu0
  %356 = vdwg.mxu0
  %v357 = vmax.f32 %v352, 0.0
  %v358 = vld [vmem:[%s7] sm:$0x1]
  %v360 = vlaneseq
  %v361 = vshrl.u32 %v360, 7
  %v362 = vsub.s32 0, %v361
  %v363 = vrot.slane %v358, %v362
  %v365 = vmul.f32 %v357, %v363
  %vm366 = vcmask 523264
  %v367 = vsel %vm366, %v365, 0.0
  %368 = vadd.xlane.f32.xlu0 %v367
  %v369 = vpop.xlane.xlu0 %368
  %v370 = vld [vmem:[#allocation2] sm:$0x1]
  %v372 = vlaneseq
  %v373 = vshrl.u32 %v372, 7
  %v374 = vsub.s32 0, %v373
  %v375 = vrot.slane %v370, %v374
  %v377 = vadd.f32 %v369, %v375
  %vm378 = vcmask 7168
  %379 = vst.msk [vmem:[%s9] sm:$0xff] %vm378, %v377
  // Predicated region
  $region38: #{tpu_custom_call.1} parent=0 // pred_check
    _
  $region39: #{tpu_custom_call.1} parent=0 // pred_check_branch
    %381 = sbr.rel (0) target = $region41
  $region40: #{tpu_custom_call.1} parent=0 // pred_region
    _
  $region41: #{tpu_custom_call.1} parent=0 // pred_fallthru
    _
  // Predicated region
  $region42: #{tpu_custom_call.1} parent=0 // pred_check
    _
  $region43: #{tpu_custom_call.1} parent=0 // pred_check_branch
    %383 = sbr.rel (0) target = $region45
  $region44: #{tpu_custom_call.1} parent=0 // pred_region
    _
  $region45: #{tpu_custom_call.1} parent=0 // pred_fallthru
    _

</llo_original>
